<compile_context>
chip_gen: v7x
topology: tpu7x:2x2x1
jax: 0.10.0
libtpu: 0.0.40
codegen_flags: <defaults>
</compile_context>

<pallas_src>
import functools

import jax
import jax.numpy as jnp
import numpy as np
from jax.experimental import pallas as pl
from jax.experimental.pallas import tpu as pltpu


# ----------------------------------------------------------------------------
# Pallas kernel: fused _Adapter forward (BN(inference) + ReLU + CSDN_Tem1)
# ----------------------------------------------------------------------------
def _adapter_kernel(x_ref, scale_ref, bias_ref, wd_ref, wp_ref, masks_ref, o_ref, *, W):
    # x_ref     : (C, L)      one image, L = H*W on the 128-lane axis, C on sublanes
    # scale_ref : (C, 1)      folded BN scale  = gamma / sqrt(var + eps)
    # bias_ref  : (C, 1)      folded BN bias   = beta - mean * scale
    # wd_ref    : (C, 9)      depthwise 3x3 weights, tap-major (c, ky*3+kx)
    # wp_ref    : (Cout, C)   pointwise 1x1 weights
    # masks_ref : (4, L)      boundary masks [col>=1, col<=W-2, row>=1, row<=H-2]
    # o_ref     : (Cout, L)   lane-dense output
    C, L = x_ref.shape

    x = x_ref[...]
    act = jnp.maximum(x * scale_ref[...] + bias_ref[...], 0.0)     # BN + ReLU
    wd = wd_ref[...]                                               # (C, 9)

    # Boundary masks (precomputed host-side; no integer div/mod on the VALU).
    cok_m = masks_ref[0:1, :]   # col - 1 >= 0   (left neighbour valid)
    cok_p = masks_ref[1:2, :]   # col + 1 < W    (right neighbour valid)
    rok_m = masks_ref[2:3, :]   # row - 1 >= 0   (upper neighbour valid)
    rok_p = masks_ref[3:4, :]   # row + 1 < H    (lower neighbour valid)

    def shift(a, s):
        # t[:, p] = a[:, (p + s) % L]; wrapped lanes are killed by the masks.
        return pltpu.roll(a, (-s) % L, axis=1)                      # XLU lane rotation

    def depthwise3x3(a):
        # zero-padded 3x3 depthwise conv (padding=1, stride=1, no bias),
        # factored to minimize VALU work (the binding slot):
        #   - horizontal shifts + column masks once (2 rolls, 2 mults),
        #   - per row offset: weight-combine the 3 taps (weights lane-broadcast),
        #   - roll the combined row by dy*W and apply the row mask once.
        # Column masks applied at the output lane stay correct after the dy*W
        # roll because whole-row shifts preserve the column index.
        s_m = shift(a, -1) * cok_m                                  # a[:, p-1]
        s_p = shift(a, +1) * cok_p                                  # a[:, p+1]
        comb_m1 = wd[:, 0:1] * s_m + wd[:, 1:2] * a + wd[:, 2:3] * s_p   # dy = -1
        comb_0  = wd[:, 3:4] * s_m + wd[:, 4:5] * a + wd[:, 5:6] * s_p   # dy =  0
        comb_p1 = wd[:, 6:7] * s_m + wd[:, 7:8] * a + wd[:, 8:9] * s_p   # dy = +1
        acc = comb_0                                                # center row: no mask, no roll
        acc = acc + shift(comb_m1, -W) * rok_m
        acc = acc + shift(comb_p1, +W) * rok_p
        return acc

    a = depthwise3x3(act)
    a = depthwise3x3(a)                                             # depth_conv applied twice

    # pointwise 1x1 conv == (Cout, C) @ (C, L) channel matmul (MXU slot is idle;
    # result last dim = L, lane-dense store).
    o_ref[...] = jnp.dot(wp_ref[...], a, preferred_element_type=jnp.float32)


@functools.lru_cache(maxsize=None)
def _boundary_masks(H, W):
    idx = np.arange(H * W)
    col = idx % W
    row = idx // W
    m = np.stack([
        col - 1 >= 0,
        col + 1 < W,
        row - 1 >= 0,
        row + 1 < H,
    ]).astype(np.float32)                                           # (4, H*W)
    return jnp.asarray(m)


def _run_adapter(x_ncl, scale, bias, wd, wp, masks, H, W):
    N, C, L = x_ncl.shape
    Cout = wp.shape[0]
    kernel = functools.partial(_adapter_kernel, W=W)
    return pl.pallas_call(
        kernel,
        out_shape=jax.ShapeDtypeStruct((N, Cout, L), jnp.float32),
        grid_spec=pltpu.PrefetchScalarGridSpec(
            num_scalar_prefetch=0,
            grid=(N,),                                              # one whole image per step
            in_specs=[
                pl.BlockSpec((pl.Squeezed(), C, L), lambda n: (n, 0, 0)),
                pl.BlockSpec((C, 1), lambda n: (0, 0)),             # constant: not re-streamed
                pl.BlockSpec((C, 1), lambda n: (0, 0)),
                pl.BlockSpec((C, 9), lambda n: (0, 0)),
                pl.BlockSpec((Cout, C), lambda n: (0, 0)),
                pl.BlockSpec((4, L), lambda n: (0, 0)),
            ],
            out_specs=pl.BlockSpec((pl.Squeezed(), Cout, L), lambda n: (n, 0, 0)),
        ),
        compiler_params=pltpu.CompilerParams(
            dimension_semantics=("parallel",),                      # shard images across TCs (v7x)
            vmem_limit_bytes=32 * 1024 * 1024,                      # fits all generations' budgets
        ),
    )(x_ncl, scale, bias, wd, wp, masks)


# ----------------------------------------------------------------------------
# _IntermediaBlock glue (stateful saved_features + param setup, plain JAX)
# ----------------------------------------------------------------------------
class IntermediaBlockPallas:
    def __init__(self, in_num, out_num, layer_num, max_link, key):
        max_in_num = in_num + max_link * out_num
        self.final_num_features = max_in_num
        self.max_link = max_link
        self.saved_features = []
        self.adapters = []
        for i in range(layer_num - 1):
            if i < max_link:
                tmp_in = in_num + (i + 1) * out_num
            else:
                tmp_in = max_in_num
            key, k1, k2 = jax.random.split(key, 3)
            c = tmp_in
            params = dict(
                gamma=1.0 + 0.05 * jnp.arange(c, dtype=jnp.float32),
                beta=0.02 * jnp.arange(c, dtype=jnp.float32) - 0.1,
                mean=0.01 * jnp.arange(c, dtype=jnp.float32),
                var=1.0 + 0.03 * jnp.arange(c, dtype=jnp.float32),
                wd=0.2 * jax.random.normal(k1, (c, 1, 3, 3), dtype=jnp.float32),
                wp=0.2 * jax.random.normal(k2, (out_num, c, 1, 1), dtype=jnp.float32),
            )
            self.adapters.append(params)

    def _apply_adapter(self, idx, feats_nchw):
        p = self.adapters[idx]
        x = jnp.concatenate(feats_nchw, axis=1)                     # torch.cat(inputs, 1), NCHW
        n, c, h, w = x.shape
        x_ncl = x.reshape(n, c, h * w).astype(jnp.float32)          # free view, no transpose
        eps = 1e-5
        # BatchNorm implemented in inference mode (folded running stats)
        inv_std = 1.0 / jnp.sqrt(p['var'] + eps)
        scale = (p['gamma'] * inv_std).reshape(c, 1)
        bias = (p['beta'] - p['mean'] * p['gamma'] * inv_std).reshape(c, 1)
        wd = p['wd'].reshape(c, 9)                                  # (C, 9) tap-major
        cout = p['wp'].shape[0]
        wp = p['wp'].reshape(cout, c)                               # (Cout, C)
        masks = _boundary_masks(h, w)                               # (4, H*W), cached per shape
        out = _run_adapter(x_ncl, scale, bias, wd, wp, masks, h, w) # (N, Cout, H*W)
        return out.reshape(n, cout, h, w)                           # free view back to NCHW

    def forward(self, x, i):
        if i == 0:
            self.saved_features = []
            if isinstance(x, jax.Array):
                if self.max_link != 0:
                    self.saved_features.append(x)
            elif isinstance(x, list):
                if self.max_link != 0:
                    self.saved_features = self.saved_features + x
            return x
        if isinstance(x, jax.Array):
            x = [x]
        if not isinstance(x, list):
            raise Exception('type(x) should be list, but it is: ', type(x))
        x = x + self.saved_features
        out = self._apply_adapter(i - 1, x)
        if i < self.max_link:
            self.saved_features.append(out)
        elif len(self.saved_features) != 0:
            self.saved_features.pop(0)
            self.saved_features.append(out)
        return out


# ----------------------------------------------------------------------------
# Pure-XLA reference for correctness checking
# ----------------------------------------------------------------------------
def _adapter_ref(p, feats_nchw):
    x = jnp.concatenate(feats_nchw, axis=1)                         # NCHW
    eps = 1e-5
    xn = (x - p['mean'][None, :, None, None]) / jnp.sqrt(
        p['var'][None, :, None, None] + eps)
    xn = xn * p['gamma'][None, :, None, None] + p['beta'][None, :, None, None]
    a = jnp.maximum(xn, 0.0)

    def dwise(t):
        return jax.lax.conv_general_dilated(
            t, p['wd'], window_strides=(1, 1), padding='SAME',
            dimension_numbers=('NCHW', 'OIHW', 'NCHW'),
            feature_group_count=t.shape[1])

    a = dwise(a)
    a = dwise(a)
    return jax.lax.conv_general_dilated(
        a, p['wp'], window_strides=(1, 1), padding='VALID',
        dimension_numbers=('NCHW', 'OIHW', 'NCHW'))


# ----------------------------------------------------------------------------
if __name__ == "__main__":
    key = jax.random.PRNGKey(0)
    in_num, out_num, layer_num, max_link = 4, 4, 3, 2
    N, H, W = 2, 16, 16

    kp, k0, k1, k2 = jax.random.split(key, 4)
    block = IntermediaBlockPallas(in_num, out_num, layer_num, max_link, kp)

    x0 = jax.random.normal(k0, (N, in_num, H, W), dtype=jnp.float32)
    x1 = jax.random.normal(k1, (N, out_num, H, W), dtype=jnp.float32)
    x2 = jax.random.normal(k2, (N, out_num, H, W), dtype=jnp.float32)

    # TODO(synk): BatchNorm is implemented in inference mode (running stats);
    # PyTorch's train-mode batch statistics are not reproduced here.
    y0 = block.forward(x0, 0)      # i == 0 path: just caches x0
    y1 = block.forward(x1, 1)      # adapters[0]: 8  -> 4 channels
    y2 = block.forward(x2, 2)      # adapters[1]: 12 -> 4 channels
    jax.block_until_ready(y1)
    jax.block_until_ready(y2)

    # correctness check against an XLA conv reference with identical state flow
    r1 = _adapter_ref(block.adapters[0], [x1, x0])
    r2 = _adapter_ref(block.adapters[1], [x2, x0, r1])
    np.testing.assert_allclose(np.array(y1), np.array(r1), rtol=1e-4, atol=1e-4)
    np.testing.assert_allclose(np.array(y2), np.array(r2), rtol=1e-4, atol=1e-4)

    print("KERNEL_OK")
</pallas_src>

<mosaic_0001>
module attributes {stable_mosaic.version = 11 : i64} {
  func.func @_adapter_kernel(%arg0: i32, %arg1: memref<1x8x256xf32, #tpu.memory_space<vmem>>, %arg2: memref<8x1xf32, #tpu.memory_space<vmem>>, %arg3: memref<8x1xf32, #tpu.memory_space<vmem>>, %arg4: memref<8x9xf32, #tpu.memory_space<vmem>>, %arg5: memref<4x8xf32, #tpu.memory_space<vmem>>, %arg6: memref<4x256xf32, #tpu.memory_space<vmem>>, %arg7: memref<1x4x256xf32, #tpu.memory_space<vmem>>) attributes {dimension_semantics = [#tpu.dimension_semantics<parallel>], iteration_bounds = array<i64: 2>, scalar_prefetch = 0 : i64, scratch_operands = 0 : i64, tpu.core_type = #tpu.core_type<tc>, window_params = [{transform_indices = @transform_0, window_bounds = array<i64: 1, 8, 256>}, {pipeline_mode = #tpu.pipeline_mode<synchronous>, transform_indices = @transform_1, window_bounds = array<i64: 8, 1>}, {pipeline_mode = #tpu.pipeline_mode<synchronous>, transform_indices = @transform_2, window_bounds = array<i64: 8, 1>}, {pipeline_mode = #tpu.pipeline_mode<synchronous>, transform_indices = @transform_3, window_bounds = array<i64: 8, 9>}, {pipeline_mode = #tpu.pipeline_mode<synchronous>, transform_indices = @transform_4, window_bounds = array<i64: 4, 8>}, {pipeline_mode = #tpu.pipeline_mode<synchronous>, transform_indices = @transform_5, window_bounds = array<i64: 4, 256>}, {transform_indices = @transform_6, window_bounds = array<i64: 1, 4, 256>}]} {
    %c0 = arith.constant 0 : index
    %c0_0 = arith.constant 0 : index
    %c0_1 = arith.constant 0 : index
    %0 = vector.load %arg1[%c0, %c0_0, %c0_1] : memref<1x8x256xf32, #tpu.memory_space<vmem>>, vector<1x8x256xf32>
    %1 = vector.shape_cast %0 : vector<1x8x256xf32> to vector<8x256xf32>
    %c0_2 = arith.constant 0 : index
    %c0_3 = arith.constant 0 : index
    %2 = vector.load %arg2[%c0_2, %c0_3] : memref<8x1xf32, #tpu.memory_space<vmem>>, vector<8x1xf32>
    %3 = vector.broadcast %2 : vector<8x1xf32> to vector<8x256xf32>
    %4 = arith.mulf %1, %3 : vector<8x256xf32>
    %c0_4 = arith.constant 0 : index
    %c0_5 = arith.constant 0 : index
    %5 = vector.load %arg3[%c0_4, %c0_5] : memref<8x1xf32, #tpu.memory_space<vmem>>, vector<8x1xf32>
    %6 = vector.broadcast %5 : vector<8x1xf32> to vector<8x256xf32>
    %7 = arith.addf %4, %6 : vector<8x256xf32>
    %cst = arith.constant 0.000000e+00 : f32
    %8 = vector.broadcast %cst : f32 to vector<8x256xf32>
    %9 = arith.maximumf %7, %8 : vector<8x256xf32>
    %c0_6 = arith.constant 0 : index
    %c0_7 = arith.constant 0 : index
    %10 = vector.load %arg4[%c0_6, %c0_7] : memref<8x9xf32, #tpu.memory_space<vmem>>, vector<8x9xf32>
    %c0_8 = arith.constant 0 : index
    %c0_9 = arith.constant 0 : index
    %11 = vector.load %arg6[%c0_8, %c0_9] : memref<4x256xf32, #tpu.memory_space<vmem>>, vector<1x256xf32>
    %c1 = arith.constant 1 : index
    %c0_10 = arith.constant 0 : index
    %12 = vector.load %arg6[%c1, %c0_10] : memref<4x256xf32, #tpu.memory_space<vmem>>, vector<1x256xf32>
    %c2 = arith.constant 2 : index
    %c0_11 = arith.constant 0 : index
    %13 = vector.load %arg6[%c2, %c0_11] : memref<4x256xf32, #tpu.memory_space<vmem>>, vector<1x256xf32>
    %c3 = arith.constant 3 : index
    %c0_12 = arith.constant 0 : index
    %14 = vector.load %arg6[%c3, %c0_12] : memref<4x256xf32, #tpu.memory_space<vmem>>, vector<1x256xf32>
    %c1_i32 = arith.constant 1 : i32
    %15 = tpu.dynamic_rotate %9 by %c1_i32 dim 1 : vector<8x256xf32>, i32 -> vector<8x256xf32>
    %16 = vector.broadcast %11 : vector<1x256xf32> to vector<8x256xf32>
    %17 = arith.mulf %15, %16 : vector<8x256xf32>
    %c255_i32 = arith.constant 255 : i32
    %18 = tpu.dynamic_rotate %9 by %c255_i32 dim 1 : vector<8x256xf32>, i32 -> vector<8x256xf32>
    %19 = vector.broadcast %12 : vector<1x256xf32> to vector<8x256xf32>
    %20 = arith.mulf %18, %19 : vector<8x256xf32>
    %21 = vector.extract_strided_slice %10 {offsets = [0, 0], sizes = [8, 1], strides = [1, 1]} : vector<8x9xf32> to vector<8x1xf32>
    %22 = vector.broadcast %21 : vector<8x1xf32> to vector<8x256xf32>
    %23 = arith.mulf %22, %17 : vector<8x256xf32>
    %24 = vector.extract_strided_slice %10 {offsets = [0, 1], sizes = [8, 1], strides = [1, 1]} : vector<8x9xf32> to vector<8x1xf32>
    %25 = vector.broadcast %24 : vector<8x1xf32> to vector<8x256xf32>
    %26 = arith.mulf %25, %9 : vector<8x256xf32>
    %27 = arith.addf %23, %26 : vector<8x256xf32>
    %28 = vector.extract_strided_slice %10 {offsets = [0, 2], sizes = [8, 1], strides = [1, 1]} : vector<8x9xf32> to vector<8x1xf32>
    %29 = vector.broadcast %28 : vector<8x1xf32> to vector<8x256xf32>
    %30 = arith.mulf %29, %20 : vector<8x256xf32>
    %31 = arith.addf %27, %30 : vector<8x256xf32>
    %32 = vector.extract_strided_slice %10 {offsets = [0, 3], sizes = [8, 1], strides = [1, 1]} : vector<8x9xf32> to vector<8x1xf32>
    %33 = vector.broadcast %32 : vector<8x1xf32> to vector<8x256xf32>
    %34 = arith.mulf %33, %17 : vector<8x256xf32>
    %35 = vector.extract_strided_slice %10 {offsets = [0, 4], sizes = [8, 1], strides = [1, 1]} : vector<8x9xf32> to vector<8x1xf32>
    %36 = vector.broadcast %35 : vector<8x1xf32> to vector<8x256xf32>
    %37 = arith.mulf %36, %9 : vector<8x256xf32>
    %38 = arith.addf %34, %37 : vector<8x256xf32>
    %39 = vector.extract_strided_slice %10 {offsets = [0, 5], sizes = [8, 1], strides = [1, 1]} : vector<8x9xf32> to vector<8x1xf32>
    %40 = vector.broadcast %39 : vector<8x1xf32> to vector<8x256xf32>
    %41 = arith.mulf %40, %20 : vector<8x256xf32>
    %42 = arith.addf %38, %41 : vector<8x256xf32>
    %43 = vector.extract_strided_slice %10 {offsets = [0, 6], sizes = [8, 1], strides = [1, 1]} : vector<8x9xf32> to vector<8x1xf32>
    %44 = vector.broadcast %43 : vector<8x1xf32> to vector<8x256xf32>
    %45 = arith.mulf %44, %17 : vector<8x256xf32>
    %46 = vector.extract_strided_slice %10 {offsets = [0, 7], sizes = [8, 1], strides = [1, 1]} : vector<8x9xf32> to vector<8x1xf32>
    %47 = vector.broadcast %46 : vector<8x1xf32> to vector<8x256xf32>
    %48 = arith.mulf %47, %9 : vector<8x256xf32>
    %49 = arith.addf %45, %48 : vector<8x256xf32>
    %50 = vector.extract_strided_slice %10 {offsets = [0, 8], sizes = [8, 1], strides = [1, 1]} : vector<8x9xf32> to vector<8x1xf32>
    %51 = vector.broadcast %50 : vector<8x1xf32> to vector<8x256xf32>
    %52 = arith.mulf %51, %20 : vector<8x256xf32>
    %53 = arith.addf %49, %52 : vector<8x256xf32>
    %c16_i32 = arith.constant 16 : i32
    %54 = tpu.dynamic_rotate %31 by %c16_i32 dim 1 : vector<8x256xf32>, i32 -> vector<8x256xf32>
    %55 = vector.broadcast %13 : vector<1x256xf32> to vector<8x256xf32>
    %56 = arith.mulf %54, %55 : vector<8x256xf32>
    %57 = arith.addf %42, %56 : vector<8x256xf32>
    %c240_i32 = arith.constant 240 : i32
    %58 = tpu.dynamic_rotate %53 by %c240_i32 dim 1 : vector<8x256xf32>, i32 -> vector<8x256xf32>
    %59 = vector.broadcast %14 : vector<1x256xf32> to vector<8x256xf32>
    %60 = arith.mulf %58, %59 : vector<8x256xf32>
    %61 = arith.addf %57, %60 : vector<8x256xf32>
    %c1_i32_13 = arith.constant 1 : i32
    %62 = tpu.dynamic_rotate %61 by %c1_i32_13 dim 1 : vector<8x256xf32>, i32 -> vector<8x256xf32>
    %63 = vector.broadcast %11 : vector<1x256xf32> to vector<8x256xf32>
    %64 = arith.mulf %62, %63 : vector<8x256xf32>
    %c255_i32_14 = arith.constant 255 : i32
    %65 = tpu.dynamic_rotate %61 by %c255_i32_14 dim 1 : vector<8x256xf32>, i32 -> vector<8x256xf32>
    %66 = vector.broadcast %12 : vector<1x256xf32> to vector<8x256xf32>
    %67 = arith.mulf %65, %66 : vector<8x256xf32>
    %68 = vector.extract_strided_slice %10 {offsets = [0, 0], sizes = [8, 1], strides = [1, 1]} : vector<8x9xf32> to vector<8x1xf32>
    %69 = vector.broadcast %68 : vector<8x1xf32> to vector<8x256xf32>
    %70 = arith.mulf %69, %64 : vector<8x256xf32>
    %71 = vector.extract_strided_slice %10 {offsets = [0, 1], sizes = [8, 1], strides = [1, 1]} : vector<8x9xf32> to vector<8x1xf32>
    %72 = vector.broadcast %71 : vector<8x1xf32> to vector<8x256xf32>
    %73 = arith.mulf %72, %61 : vector<8x256xf32>
    %74 = arith.addf %70, %73 : vector<8x256xf32>
    %75 = vector.extract_strided_slice %10 {offsets = [0, 2], sizes = [8, 1], strides = [1, 1]} : vector<8x9xf32> to vector<8x1xf32>
    %76 = vector.broadcast %75 : vector<8x1xf32> to vector<8x256xf32>
    %77 = arith.mulf %76, %67 : vector<8x256xf32>
    %78 = arith.addf %74, %77 : vector<8x256xf32>
    %79 = vector.extract_strided_slice %10 {offsets = [0, 3], sizes = [8, 1], strides = [1, 1]} : vector<8x9xf32> to vector<8x1xf32>
    %80 = vector.broadcast %79 : vector<8x1xf32> to vector<8x256xf32>
    %81 = arith.mulf %80, %64 : vector<8x256xf32>
    %82 = vector.extract_strided_slice %10 {offsets = [0, 4], sizes = [8, 1], strides = [1, 1]} : vector<8x9xf32> to vector<8x1xf32>
    %83 = vector.broadcast %82 : vector<8x1xf32> to vector<8x256xf32>
    %84 = arith.mulf %83, %61 : vector<8x256xf32>
    %85 = arith.addf %81, %84 : vector<8x256xf32>
    %86 = vector.extract_strided_slice %10 {offsets = [0, 5], sizes = [8, 1], strides = [1, 1]} : vector<8x9xf32> to vector<8x1xf32>
    %87 = vector.broadcast %86 : vector<8x1xf32> to vector<8x256xf32>
    %88 = arith.mulf %87, %67 : vector<8x256xf32>
    %89 = arith.addf %85, %88 : vector<8x256xf32>
    %90 = vector.extract_strided_slice %10 {offsets = [0, 6], sizes = [8, 1], strides = [1, 1]} : vector<8x9xf32> to vector<8x1xf32>
    %91 = vector.broadcast %90 : vector<8x1xf32> to vector<8x256xf32>
    %92 = arith.mulf %91, %64 : vector<8x256xf32>
    %93 = vector.extract_strided_slice %10 {offsets = [0, 7], sizes = [8, 1], strides = [1, 1]} : vector<8x9xf32> to vector<8x1xf32>
    %94 = vector.broadcast %93 : vector<8x1xf32> to vector<8x256xf32>
    %95 = arith.mulf %94, %61 : vector<8x256xf32>
    %96 = arith.addf %92, %95 : vector<8x256xf32>
    %97 = vector.extract_strided_slice %10 {offsets = [0, 8], sizes = [8, 1], strides = [1, 1]} : vector<8x9xf32> to vector<8x1xf32>
    %98 = vector.broadcast %97 : vector<8x1xf32> to vector<8x256xf32>
    %99 = arith.mulf %98, %67 : vector<8x256xf32>
    %100 = arith.addf %96, %99 : vector<8x256xf32>
    %c16_i32_15 = arith.constant 16 : i32
    %101 = tpu.dynamic_rotate %78 by %c16_i32_15 dim 1 : vector<8x256xf32>, i32 -> vector<8x256xf32>
    %102 = vector.broadcast %13 : vector<1x256xf32> to vector<8x256xf32>
    %103 = arith.mulf %101, %102 : vector<8x256xf32>
    %104 = arith.addf %89, %103 : vector<8x256xf32>
    %c240_i32_16 = arith.constant 240 : i32
    %105 = tpu.dynamic_rotate %100 by %c240_i32_16 dim 1 : vector<8x256xf32>, i32 -> vector<8x256xf32>
    %106 = vector.broadcast %14 : vector<1x256xf32> to vector<8x256xf32>
    %107 = arith.mulf %105, %106 : vector<8x256xf32>
    %108 = arith.addf %104, %107 : vector<8x256xf32>
    %c0_17 = arith.constant 0 : index
    %c0_18 = arith.constant 0 : index
    %109 = vector.load %arg5[%c0_17, %c0_18] : memref<4x8xf32, #tpu.memory_space<vmem>>, vector<4x8xf32>
    %cst_19 = arith.constant dense<0.000000e+00> : vector<4x256xf32>
    %110 = tpu.matmul %109, %108, %cst_19 {dimension_numbers = #tpu.dot_dimension_numbers<[1], [0], [0], [1], [0, 0, 1, 1], [], []>} : vector<4x8xf32>, vector<8x256xf32>, vector<4x256xf32> -> vector<4x256xf32>
    %c0_20 = arith.constant 0 : index
    %c0_21 = arith.constant 0 : index
    %c0_22 = arith.constant 0 : index
    %111 = vector.load %arg7[%c0_20, %c0_21, %c0_22] : memref<1x4x256xf32, #tpu.memory_space<vmem>>, vector<1x4x256xf32>
    %112 = vector.shape_cast %111 : vector<1x4x256xf32> to vector<4x256xf32>
    %113 = vector.shape_cast %110 : vector<4x256xf32> to vector<1x4x256xf32>
    tpu.vector_store %arg7[%c0_20, %c0_21, %c0_22], %113 {strides = array<i32>} : memref<1x4x256xf32, #tpu.memory_space<vmem>>, vector<1x4x256xf32>,
    return
  }
  func.func @transform_0(%arg0: i32) -> (i32, i32, i32) {
    %c0_i32 = arith.constant 0 : i32
    %c0_i32_0 = arith.constant 0 : i32
    %c0_i32_1 = arith.constant 0 : i32
    return %arg0, %c0_i32, %c0_i32_0 : i32, i32, i32
  }
  func.func @transform_1(%arg0: i32) -> (i32, i32) {
    %c0_i32 = arith.constant 0 : i32
    %c0_i32_0 = arith.constant 0 : i32
    %c0_i32_1 = arith.constant 0 : i32
    return %c0_i32, %c0_i32_0 : i32, i32
  }
  func.func @transform_2(%arg0: i32) -> (i32, i32) {
    %c0_i32 = arith.constant 0 : i32
    %c0_i32_0 = arith.constant 0 : i32
    %c0_i32_1 = arith.constant 0 : i32
    return %c0_i32, %c0_i32_0 : i32, i32
  }
  func.func @transform_3(%arg0: i32) -> (i32, i32) {
    %c0_i32 = arith.constant 0 : i32
    %c0_i32_0 = arith.constant 0 : i32
    %c0_i32_1 = arith.constant 0 : i32
    return %c0_i32, %c0_i32_0 : i32, i32
  }
  func.func @transform_4(%arg0: i32) -> (i32, i32) {
    %c0_i32 = arith.constant 0 : i32
    %c0_i32_0 = arith.constant 0 : i32
    %c0_i32_1 = arith.constant 0 : i32
    return %c0_i32, %c0_i32_0 : i32, i32
  }
  func.func @transform_5(%arg0: i32) -> (i32, i32) {
    %c0_i32 = arith.constant 0 : i32
    %c0_i32_0 = arith.constant 0 : i32
    %c0_i32_1 = arith.constant 0 : i32
    return %c0_i32, %c0_i32_0 : i32, i32
  }
  func.func @transform_6(%arg0: i32) -> (i32, i32, i32) {
    %c0_i32 = arith.constant 0 : i32
    %c0_i32_0 = arith.constant 0 : i32
    %c0_i32_1 = arith.constant 0 : i32
    return %arg0, %c0_i32, %c0_i32_0 : i32, i32, i32
  }
}

</mosaic_0001>

<llo_original>
// kernel: tpu_custom_call.1
$region0: #{tpu_custom_call.1}
  #allocation0 [shape = 'u32[]', space=smem, size = 0x4, offset = 0x4, fixed_abs, tag = 'smem constant byte address 0x4 - core index']
  #allocation1 [shape = 'u32[144,128]{1,0:T(1,128)}', space=vmem, size = 0x12000, scoped, tag = 'internal scratch']
  %s0 = inlined_call_operand.hbm [shape: f32[2,8,256], index: 0, kind: input, shape index: {}]
  %s1 = inlined_call_operand.vmem [shape: f32[8,1], index: 1, kind: input, shape index: {}]
  %s2 = inlined_call_operand.vmem [shape: f32[8,1], index: 2, kind: input, shape index: {}]
  %s3 = inlined_call_operand.vmem [shape: f32[8,9], index: 3, kind: input, shape index: {}]
  %s4 = inlined_call_operand.vmem [shape: f32[4,8], index: 4, kind: input, shape index: {}]
  %s5 = inlined_call_operand.vmem [shape: f32[4,256], index: 5, kind: input, shape index: {}]
  %s6 = inlined_call_operand.hbm [shape: f32[2,4,256], index: 6, kind: output, shape index: {}]
  %s7 = sld [smem:[#allocation0]]
  $region61: #{tpu_custom_call.1} parent=0
    _
  %s9 = ssub.s32 1, %s7
  %s10 = scalar_select 0, %s9, %s7
  $region1: #{tpu_custom_call.1} parent=0
    #allocation2 [shape = 'u8[16384]{0}', space=vmem, size = 0x4000, scoped, tag = 'input window, operand 0']
    #allocation3 [shape = 's32[2]{0}', space=sflag, size = 0x8, scoped, tag = 'scoped memory for tpu_custom_call.1']
    #allocation4 [shape = 's32[2]{0}', space=sflag, size = 0x8, scoped, tag = 'scoped memory for tpu_custom_call.1']
    #allocation5 [shape = 'u8[8192]{0}', space=vmem, size = 0x2000, scoped, tag = 'output window, operand 0']
    %11 = vsyncpa [#allocation3], 0
    %s12 = scalar_lea.sflag [#allocation3], 1
    %13 = vsyncpa %s12, 0
    %14 = vsyncpa [#allocation4], 0
    %s15 = scalar_lea.sflag [#allocation4], 1
    %16 = vsyncpa %s15, 0
    loop: start=0, step=1, limit=4
    $region2: #{tpu_custom_call.1} parent=1 // loop_pre_header
      _
    $region3: #{tpu_custom_call.1} parent=1 // loop_header
      %s18 = sphi 0, %s22
      %p19 = scmp.ge.s32.totalorder %s18, 4
      %s28 = sphi 0, %s30
      %s31 = sphi 0, %s28
      %s32 = sphi 0, %s31
      %s48 = sphi 0, %s32
      %s52 = sphi 0, %s52
      %s54 = sphi 0, %s52
      %s55 = sphi 0, %s54
      %s69 = sphi 0, %s55
      %s73 = sphi 0, %s73
      %s75 = sphi 0, %s73
      %s76 = sphi 0, %s75
      %s90 = sphi 0, %s76
      %s94 = sphi 0, %s94
      %s96 = sphi 0, %s94
      %s97 = sphi 0, %s96
      %s111 = sphi 0, %s97
      %s115 = sphi 0, %s115
      %s117 = sphi 0, %s115
      %s118 = sphi 0, %s117
      %s132 = sphi 0, %s118
      %s136 = sphi 0, %s136
      %s138 = sphi 0, %s136
      %s139 = sphi 0, %s138
      %s153 = sphi 0, %s139
      %s159 = sphi 0, %s161
      %s162 = sphi 0, %s159
      %s163 = sphi 0, %s162
      %s179 = sphi 0, %s163
    $region4: #{tpu_custom_call.1} parent=1 // loop_header_branch
      %21 = sbr.rel (%p19) target = $region8
    $region5: #{tpu_custom_call.1} parent=1 // loop_body
      %s23 = ssub.s32 %s18, 1
      %s24 = ssub.s32 %s18, 2
      %s25 = sadd.s32 %s18, 1
      %s26 = ssub.s32 %s18, %s25
      %p27 = scmp.eq.s32.totalorder %s26, 0
      %s29 = sadd.s32 %s28, 1
      %s30 = scalar_select %p27, %s28, %s29
      %p33 = pneg %p27
      %p34 = scmp.eq.s32.totalorder %s18, 1
      %p35 = por %p33, %p34
      %p36 = scmp.ne.s32.totalorder %s28, %s31
      %p37 = scmp.eq.s32.totalorder %s18, 0
      %p38 = por %p36, %p37
      %p39 = scmp.ne.s32.totalorder %s28, %s31
      %p40 = scmp.eq.s32.totalorder %s23, 1
      %p41 = por %p39, %p40
      %p42 = scmp.ne.s32.totalorder %s31, %s32
      %p43 = scmp.eq.s32.totalorder %s23, 0
      %p44 = por %p42, %p43
      %p45 = scmp.ne.s32.totalorder %s31, %s32
      %p46 = scmp.eq.s32.totalorder %s24, 1
      %p47 = por %p45, %p46
      %p49 = scmp.ne.s32.totalorder %s32, %s48
      %p50 = scmp.eq.s32.totalorder %s24, 0
      %p51 = por %p49, %p50
      %s53 = sadd.s32 %s52, 1
      %p56 = scmp.eq.s32.totalorder %s18, 1
      %p57 = scmp.ne.s32.totalorder %s52, %s54
      %p58 = scmp.eq.s32.totalorder %s18, 0
      %p59 = por %p57, %p58
      %p60 = scmp.ne.s32.totalorder %s52, %s54
      %p61 = scmp.eq.s32.totalorder %s23, 1
      %p62 = por %p60, %p61
      %p63 = scmp.ne.s32.totalorder %s54, %s55
      %p64 = scmp.eq.s32.totalorder %s23, 0
      %p65 = por %p63, %p64
      %p66 = scmp.ne.s32.totalorder %s54, %s55
      %p67 = scmp.eq.s32.totalorder %s24, 1
      %p68 = por %p66, %p67
      %p70 = scmp.ne.s32.totalorder %s55, %s69
      %p71 = scmp.eq.s32.totalorder %s24, 0
      %p72 = por %p70, %p71
      %s74 = sadd.s32 %s73, 1
      %p77 = scmp.eq.s32.totalorder %s18, 1
      %p78 = scmp.ne.s32.totalorder %s73, %s75
      %p79 = scmp.eq.s32.totalorder %s18, 0
      %p80 = por %p78, %p79
      %p81 = scmp.ne.s32.totalorder %s73, %s75
      %p82 = scmp.eq.s32.totalorder %s23, 1
      %p83 = por %p81, %p82
      %p84 = scmp.ne.s32.totalorder %s75, %s76
      %p85 = scmp.eq.s32.totalorder %s23, 0
      %p86 = por %p84, %p85
      %p87 = scmp.ne.s32.totalorder %s75, %s76
      %p88 = scmp.eq.s32.totalorder %s24, 1
      %p89 = por %p87, %p88
      %p91 = scmp.ne.s32.totalorder %s76, %s90
      %p92 = scmp.eq.s32.totalorder %s24, 0
      %p93 = por %p91, %p92
      %s95 = sadd.s32 %s94, 1
      %p98 = scmp.eq.s32.totalorder %s18, 1
      %p99 = scmp.ne.s32.totalorder %s94, %s96
      %p100 = scmp.eq.s32.totalorder %s18, 0
      %p101 = por %p99, %p100
      %p102 = scmp.ne.s32.totalorder %s94, %s96
      %p103 = scmp.eq.s32.totalorder %s23, 1
      %p104 = por %p102, %p103
      %p105 = scmp.ne.s32.totalorder %s96, %s97
      %p106 = scmp.eq.s32.totalorder %s23, 0
      %p107 = por %p105, %p106
      %p108 = scmp.ne.s32.totalorder %s96, %s97
      %p109 = scmp.eq.s32.totalorder %s24, 1
      %p110 = por %p108, %p109
      %p112 = scmp.ne.s32.totalorder %s97, %s111
      %p113 = scmp.eq.s32.totalorder %s24, 0
      %p114 = por %p112, %p113
      %s116 = sadd.s32 %s115, 1
      %p119 = scmp.eq.s32.totalorder %s18, 1
      %p120 = scmp.ne.s32.totalorder %s115, %s117
      %p121 = scmp.eq.s32.totalorder %s18, 0
      %p122 = por %p120, %p121
      %p123 = scmp.ne.s32.totalorder %s115, %s117
      %p124 = scmp.eq.s32.totalorder %s23, 1
      %p125 = por %p123, %p124
      %p126 = scmp.ne.s32.totalorder %s117, %s118
      %p127 = scmp.eq.s32.totalorder %s23, 0
      %p128 = por %p126, %p127
      %p129 = scmp.ne.s32.totalorder %s117, %s118
      %p130 = scmp.eq.s32.totalorder %s24, 1
      %p131 = por %p129, %p130
      %p133 = scmp.ne.s32.totalorder %s118, %s132
      %p134 = scmp.eq.s32.totalorder %s24, 0
      %p135 = por %p133, %p134
      %s137 = sadd.s32 %s136, 1
      %p140 = scmp.eq.s32.totalorder %s18, 1
      %p141 = scmp.ne.s32.totalorder %s136, %s138
      %p142 = scmp.eq.s32.totalorder %s18, 0
      %p143 = por %p141, %p142
      %p144 = scmp.ne.s32.totalorder %s136, %s138
      %p145 = scmp.eq.s32.totalorder %s23, 1
      %p146 = por %p144, %p145
      %p147 = scmp.ne.s32.totalorder %s138, %s139
      %p148 = scmp.eq.s32.totalorder %s23, 0
      %p149 = por %p147, %p148
      %p150 = scmp.ne.s32.totalorder %s138, %s139
      %p151 = scmp.eq.s32.totalorder %s24, 1
      %p152 = por %p150, %p151
      %p154 = scmp.ne.s32.totalorder %s139, %s153
      %p155 = scmp.eq.s32.totalorder %s24, 0
      %p156 = por %p154, %p155
      %s157 = ssub.s32 %s18, %s25
      %p158 = scmp.eq.s32.totalorder %s157, 0
      %s160 = sadd.s32 %s159, 1
      %s161 = scalar_select %p158, %s159, %s160
      %p164 = pneg %p158
      %p165 = scmp.eq.s32.totalorder %s18, 1
      %p166 = por %p164, %p165
      %p167 = scmp.ne.s32.totalorder %s159, %s162
      %p168 = scmp.eq.s32.totalorder %s18, 0
      %p169 = por %p167, %p168
      %p170 = scmp.ne.s32.totalorder %s159, %s162
      %p171 = scmp.eq.s32.totalorder %s23, 1
      %p172 = por %p170, %p171
      %p173 = scmp.ne.s32.totalorder %s162, %s163
      %p174 = scmp.eq.s32.totalorder %s23, 0
      %p175 = por %p173, %p174
      %p176 = scmp.ne.s32.totalorder %s162, %s163
      %p177 = scmp.eq.s32.totalorder %s24, 1
      %p178 = por %p176, %p177
      %p180 = scmp.ne.s32.totalorder %s163, %s179
      %p181 = scmp.eq.s32.totalorder %s24, 0
      %p182 = por %p180, %p181
      %p183 = scmp.le.s32.totalorder 1, %s18
      %p184 = scmp.lt.s32.totalorder %s18, 3
      %p185 = pnand %p183, %p184
      %p186 = pneg %p185
      // Predicated region
      $region9: #{tpu_custom_call.1} parent=5 // pred_check
        _
      $region10: #{tpu_custom_call.1} parent=5 // pred_check_branch
        %188 = sbr.rel (%p185) target = $region12
      $region11: #{tpu_custom_call.1} parent=5 // pred_region
        %s189 = ssub.s32 %s18, 1
        // Predicated region
        $region13: #{tpu_custom_call.1} parent=11 // pred_check
          %p190 = pneg %p65
        $region14: #{tpu_custom_call.1} parent=11 // pred_check_branch
          %192 = sbr.rel (%p190) target = $region16
        $region15: #{tpu_custom_call.1} parent=11 // pred_region
          _
        $region16: #{tpu_custom_call.1} parent=11 // pred_fallthru
          _
        // Predicated region
        $region17: #{tpu_custom_call.1} parent=11 // pred_check
          %p193 = pneg %p86
        $region18: #{tpu_custom_call.1} parent=11 // pred_check_branch
          %195 = sbr.rel (%p193) target = $region20
        $region19: #{tpu_custom_call.1} parent=11 // pred_region
          _
        $region20: #{tpu_custom_call.1} parent=11 // pred_fallthru
          _
        // Predicated region
        $region21: #{tpu_custom_call.1} parent=11 // pred_check
          %p196 = pneg %p107
        $region22: #{tpu_custom_call.1} parent=11 // pred_check_branch
          %198 = sbr.rel (%p196) target = $region24
        $region23: #{tpu_custom_call.1} parent=11 // pred_region
          _
        $region24: #{tpu_custom_call.1} parent=11 // pred_fallthru
          _
        // Predicated region
        $region25: #{tpu_custom_call.1} parent=11 // pred_check
          %p199 = pneg %p128
        $region26: #{tpu_custom_call.1} parent=11 // pred_check_branch
          %201 = sbr.rel (%p199) target = $region28
        $region27: #{tpu_custom_call.1} parent=11 // pred_region
          _
        $region28: #{tpu_custom_call.1} parent=11 // pred_fallthru
          _
        // Predicated region
        $region29: #{tpu_custom_call.1} parent=11 // pred_check
          %p202 = pneg %p149
        $region30: #{tpu_custom_call.1} parent=11 // pred_check_branch
          %204 = sbr.rel (%p202) target = $region32
        $region31: #{tpu_custom_call.1} parent=11 // pred_region
          _
        $region32: #{tpu_custom_call.1} parent=11 // pred_fallthru
          _
      $region12: #{tpu_custom_call.1} parent=5 // pred_fallthru
        _
      %p205 = scmp.lt.s32.totalorder %s18, 2
      // Predicated region
      $region33: #{tpu_custom_call.1} parent=5 // pred_check
        %p206 = pneg %p205
      $region34: #{tpu_custom_call.1} parent=5 // pred_check_branch
        %208 = sbr.rel (%p206) target = $region36
      $region35: #{tpu_custom_call.1} parent=5 // pred_region
        // Predicated region
        $region37: #{tpu_custom_call.1} parent=35 // pred_check
          %p209 = pneg %p38
        $region38: #{tpu_custom_call.1} parent=35 // pred_check_branch
          %211 = sbr.rel (%p209) target = $region40
        $region39: #{tpu_custom_call.1} parent=35 // pred_region
          %s212 = sand.u32 %s28, 1
          %s213 = scalar_lea.sflag [#allocation3], %s212
          %s214 = sand.u32 %s28, 1
          %s215 = smul.addr %s214, 16
          %s216 = scalar_lea.vmem [#allocation2], %s215
          %s218 = ssub.s32 256, 256
          %219 = vsyncadd %s213, %s218
          %s220 = smul.addr %s18, 2
          %s221 = smul.addr %s220, 128
          %s222 = scalar_lea.hbm %s0, %s221
          %s224 = sshll.u32 %s216, 4
          %s225 = int_to_ptr.vmem [resolvable:$true] %s224
          %227 = dma.hbm_to_vmem [thread:$0]  %s222, 256, %s225, %s213
        $region40: #{tpu_custom_call.1} parent=35 // pred_fallthru
          _
      $region36: #{tpu_custom_call.1} parent=5 // pred_fallthru
        _
      %p228 = scmp.le.s32.totalorder 1, %s18
      %p229 = scmp.lt.s32.totalorder %s18, 3
      %p230 = pnand %p228, %p229
      %p231 = pneg %p230
      // Predicated region
      $region41: #{tpu_custom_call.1} parent=5 // pred_check
        _
      $region42: #{tpu_custom_call.1} parent=5 // pred_check_branch
        %233 = sbr.rel (%p230) target = $region44
      $region43: #{tpu_custom_call.1} parent=5 // pred_region
        %s234 = ssub.s32 %s18, 1
        %s235 = sand.u32 %s31, 1
        %s236 = scalar_lea.sflag [#allocation3], %s235
        %s237 = sand.u32 %s31, 1
        %s238 = smul.addr %s237, 16
        %s239 = scalar_lea.vmem [#allocation2], %s238
        // Predicated region
        $region45: #{tpu_custom_call.1} parent=43 // pred_check
          %p240 = pneg %p44
        $region46: #{tpu_custom_call.1} parent=43 // pred_check_branch
          %242 = sbr.rel (%p240) target = $region48
        $region47: #{tpu_custom_call.1} parent=43 // pred_region
          %243 = dma.done %s236, 256
        $region48: #{tpu_custom_call.1} parent=43 // pred_fallthru
          _
        %s244 = sand.u32 %s31, 1
        %s245 = scalar_lea.sflag [#allocation3], %s244
        %s246 = sand.u32 %s31, 1
        %s247 = smul.addr %s246, 16
        %s248 = scalar_lea.vmem [#allocation2], %s247
        %p249 = pneg %p44
        %p250 = pneg %p41
        %p251 = pneg %p65
        %p252 = pneg %p62
        %p253 = pneg %p86
        %p254 = pneg %p83
        %p255 = pneg %p107
        %p256 = pneg %p104
        %p257 = pneg %p128
        %p258 = pneg %p125
        %p259 = pneg %p149
        %p260 = pneg %p146
        %p261 = pneg %p175
        %p262 = pneg %p172
        %s263 = sand.u32 %s162, 1
        %s264 = scalar_lea.sflag [#allocation4], %s263
        %s265 = sand.u32 %s162, 1
        %s266 = smul.addr %s265, 8
        %s267 = scalar_lea.vmem [#allocation5], %s266
        %v268 = vld [vmem:[%s239] sm:$0xff]
        %v269 = vld [vmem:[%s239 + $0x8] sm:$0xff]
        %v270 = vld [vmem:[%s1] sm:$0xff]
        %272 = vset.pattern.permute.xlu0 0
        %273 = vperm.xlu0 %272, %v270
        %v274 = vpop.permute.xlu0 %273
        %v276 = vmul.f32 %v268, %v274
        %v277 = vmul.f32 %v269, %v274
        %v278 = vld [vmem:[%s2] sm:$0xff]
        %280 = vset.pattern.permute.xlu0 0
        %281 = vperm.xlu0 %280, %v278
        %v282 = vpop.permute.xlu0 %281
        %v284 = vadd.f32 %v276, %v282
        %v285 = vadd.f32 %v277, %v282
        %v286 = vmax.f32 %v284, 0.0
        %v287 = vmax.f32 %v285, 0.0
        %v288 = vld [vmem:[%s3] sm:$0xff]
        %v289 = vld [vmem:[%s5] ss:$4 sm:$0x3]
        %s290 = scalar_lea.vmem %s5, 1
        %v291 = vld [vmem:[%s290] ss:$4 sm:$0x3]
        %s292 = scalar_lea.vmem %s5, 2
        %v293 = vld [vmem:[%s292] ss:$4 sm:$0x3]
        %s294 = scalar_lea.vmem %s5, 3
        %v295 = vld [vmem:[%s294] ss:$4 sm:$0x3]
        %296 = vrot.lane.b32.xlu0 %v286, 1
        %v297 = vpop.permute.xlu0 %296
        %298 = vrot.lane.b32.xlu0 %v287, 1
        %v299 = vpop.permute.xlu0 %298
        %v300 = vlaneseq
        %v301 = vand.u32 %v300, 127
        %vm302 = vcmp.lt.s32.totalorder %v301, 1
        %v303 = vsel %vm302, %v297, %v299
        %v304 = vsel %vm302, %v299, %v297
        %v306 = vlaneseq
        %v307 = vshrl.u32 %v306, 7
        %v308 = vsub.s32 0, %v307
        %v309 = vrot.slane %v289, %v308
        %v310 = vlaneseq
        %v311 = vshrl.u32 %v310, 7
        %v312 = vsub.s32 1, %v311
        %v313 = vrot.slane %v289, %v312
        %v316 = vmul.f32 %v304, %v309
        %v317 = vmul.f32 %v303, %v313
        %318 = vrot.lane.b32.xlu0 %v286, 127
        %v319 = vpop.permute.xlu0 %318
        %320 = vrot.lane.b32.xlu0 %v287, 127
        %v321 = vpop.permute.xlu0 %320
        %vm322 = vcmp.lt.s32.totalorder %v301, 127
        %v323 = vsel %vm322, %v319, %v321
        %v324 = vsel %vm322, %v321, %v319
        %v326 = vlaneseq
        %v327 = vshrl.u32 %v326, 7
        %v328 = vsub.s32 0, %v327
        %v329 = vrot.slane %v291, %v328
        %v330 = vlaneseq
        %v331 = vshrl.u32 %v330, 7
        %v332 = vsub.s32 1, %v331
        %v333 = vrot.slane %v291, %v332
        %v336 = vmul.f32 %v323, %v329
        %v337 = vmul.f32 %v324, %v333
        %339 = vset.pattern.permute.xlu0 0
        %340 = vperm.xlu0 %339, %v288
        %v341 = vpop.permute.xlu0 %340
        %v343 = vmul.f32 %v341, %v316
        %v344 = vmul.f32 %v341, %v317
        %345 = vset.pattern.permute.xlu0 1
        %346 = vperm.xlu0 %345, %v288
        %v347 = vpop.permute.xlu0 %346
        %v349 = vmul.f32 %v347, %v286
        %v350 = vmul.f32 %v347, %v287
        %v351 = vadd.f32 %v343, %v349
        %v352 = vadd.f32 %v344, %v350
        %353 = vset.pattern.permute.xlu0 2
        %354 = vperm.xlu0 %353, %v288
        %v355 = vpop.permute.xlu0 %354
        %v357 = vmul.f32 %v355, %v336
        %v358 = vmul.f32 %v355, %v337
        %v359 = vadd.f32 %v351, %v357
        %v360 = vadd.f32 %v352, %v358
        %361 = vset.pattern.permute.xlu0 3
        %362 = vperm.xlu0 %361, %v288
        %v363 = vpop.permute.xlu0 %362
        %v365 = vmul.f32 %v363, %v316
        %v366 = vmul.f32 %v363, %v317
        %367 = vset.pattern.permute.xlu0 4
        %368 = vperm.xlu0 %367, %v288
        %v369 = vpop.permute.xlu0 %368
        %v371 = vmul.f32 %v369, %v286
        %v372 = vmul.f32 %v369, %v287
        %v373 = vadd.f32 %v365, %v371
        %v374 = vadd.f32 %v366, %v372
        %375 = vset.pattern.permute.xlu0 5
        %376 = vperm.xlu0 %375, %v288
        %v377 = vpop.permute.xlu0 %376
        %v379 = vmul.f32 %v377, %v336
        %v380 = vmul.f32 %v377, %v337
        %v381 = vadd.f32 %v373, %v379
        %v382 = vadd.f32 %v374, %v380
        %383 = vset.pattern.permute.xlu0 6
        %384 = vperm.xlu0 %383, %v288
        %v385 = vpop.permute.xlu0 %384
        %v387 = vmul.f32 %v385, %v316
        %v388 = vmul.f32 %v385, %v317
        %389 = vset.pattern.permute.xlu0 7
        %390 = vperm.xlu0 %389, %v288
        %v391 = vpop.permute.xlu0 %390
        %v393 = vmul.f32 %v391, %v286
        %v394 = vmul.f32 %v391, %v287
        %v395 = vadd.f32 %v387, %v393
        %v396 = vadd.f32 %v388, %v394
        %397 = vset.pattern.permute.xlu0 8
        %398 = vperm.xlu0 %397, %v288
        %v399 = vpop.permute.xlu0 %398
        %v401 = vmul.f32 %v399, %v336
        %v402 = vmul.f32 %v399, %v337
        %v403 = vadd.f32 %v395, %v401
        %v404 = vadd.f32 %v396, %v402
        %405 = vrot.lane.b32.xlu0 %v359, 16
        %v406 = vpop.permute.xlu0 %405
        %407 = vrot.lane.b32.xlu0 %v360, 16
        %v408 = vpop.permute.xlu0 %407
        %vm409 = vcmp.lt.s32.totalorder %v301, 16
        %v410 = vsel %vm409, %v406, %v408
        %v411 = vsel %vm409, %v408, %v406
        %v413 = vlaneseq
        %v414 = vshrl.u32 %v413, 7
        %v415 = vsub.s32 0, %v414
        %v416 = vrot.slane %v293, %v415
        %v417 = vlaneseq
        %v418 = vshrl.u32 %v417, 7
        %v419 = vsub.s32 1, %v418
        %v420 = vrot.slane %v293, %v419
        %v423 = vmul.f32 %v411, %v416
        %v424 = vmul.f32 %v410, %v420
        %v425 = vadd.f32 %v381, %v423
        %v426 = vadd.f32 %v382, %v424
        %427 = vrot.lane.b32.xlu0 %v403, 112
        %v428 = vpop.permute.xlu0 %427
        %429 = vrot.lane.b32.xlu0 %v404, 112
        %v430 = vpop.permute.xlu0 %429
        %vm431 = vcmp.lt.s32.totalorder %v301, 112
        %v432 = vsel %vm431, %v428, %v430
        %v433 = vsel %vm431, %v430, %v428
        %v435 = vlaneseq
        %v436 = vshrl.u32 %v435, 7
        %v437 = vsub.s32 0, %v436
        %v438 = vrot.slane %v295, %v437
        %v439 = vlaneseq
        %v440 = vshrl.u32 %v439, 7
        %v441 = vsub.s32 1, %v440
        %v442 = vrot.slane %v295, %v441
        %v445 = vmul.f32 %v432, %v438
        %v446 = vmul.f32 %v433, %v442
        %v447 = vadd.f32 %v425, %v445
        %v448 = vadd.f32 %v426, %v446
        %449 = vrot.lane.b32.xlu0 %v447, 1
        %v450 = vpop.permute.xlu0 %449
        %451 = vrot.lane.b32.xlu0 %v448, 1
        %v452 = vpop.permute.xlu0 %451
        %v453 = vsel %vm302, %v450, %v452
        %v454 = vsel %vm302, %v452, %v450
        %v455 = vmul.f32 %v454, %v309
        %v456 = vmul.f32 %v453, %v313
        %457 = vrot.lane.b32.xlu0 %v447, 127
        %v458 = vpop.permute.xlu0 %457
        %459 = vrot.lane.b32.xlu0 %v448, 127
        %v460 = vpop.permute.xlu0 %459
        %v461 = vsel %vm322, %v458, %v460
        %v462 = vsel %vm322, %v460, %v458
        %v463 = vmul.f32 %v461, %v329
        %v464 = vmul.f32 %v462, %v333
        %v465 = vmul.f32 %v341, %v455
        %v466 = vmul.f32 %v341, %v456
        %v467 = vmul.f32 %v347, %v447
        %v468 = vmul.f32 %v347, %v448
        %v469 = vadd.f32 %v465, %v467
        %v470 = vadd.f32 %v466, %v468
        %v471 = vmul.f32 %v355, %v463
        %v472 = vmul.f32 %v355, %v464
        %v473 = vadd.f32 %v469, %v471
        %v474 = vadd.f32 %v470, %v472
        %v475 = vmul.f32 %v363, %v455
        %v476 = vmul.f32 %v363, %v456
        %v477 = vmul.f32 %v369, %v447
        %v478 = vmul.f32 %v369, %v448
        %v479 = vadd.f32 %v475, %v477
        %v480 = vadd.f32 %v476, %v478
        %v481 = vmul.f32 %v377, %v463
        %v482 = vmul.f32 %v377, %v464
        %v483 = vadd.f32 %v479, %v481
        %v484 = vadd.f32 %v480, %v482
        %v485 = vmul.f32 %v385, %v455
        %v486 = vmul.f32 %v385, %v456
        %v487 = vmul.f32 %v391, %v447
        %v488 = vmul.f32 %v391, %v448
        %v489 = vadd.f32 %v485, %v487
        %v490 = vadd.f32 %v486, %v488
        %v491 = vmul.f32 %v399, %v463
        %v492 = vmul.f32 %v399, %v464
        %v493 = vadd.f32 %v489, %v491
        %v494 = vadd.f32 %v490, %v492
        %495 = vrot.lane.b32.xlu0 %v473, 16
        %v496 = vpop.permute.xlu0 %495
        %497 = vrot.lane.b32.xlu0 %v474, 16
        %v498 = vpop.permute.xlu0 %497
        %v499 = vsel %vm409, %v496, %v498
        %v500 = vsel %vm409, %v498, %v496
        %v501 = vmul.f32 %v500, %v416
        %v502 = vmul.f32 %v499, %v420
        %v503 = vadd.f32 %v483, %v501
        %v504 = vadd.f32 %v484, %v502
        %505 = vrot.lane.b32.xlu0 %v493, 112
        %v506 = vpop.permute.xlu0 %505
        %507 = vrot.lane.b32.xlu0 %v494, 112
        %v508 = vpop.permute.xlu0 %507
        %v509 = vsel %vm431, %v506, %v508
        %v510 = vsel %vm431, %v508, %v506
        %v511 = vmul.f32 %v509, %v438
        %v512 = vmul.f32 %v510, %v442
        %v513 = vadd.f32 %v503, %v511
        %v514 = vadd.f32 %v504, %v512
        %v515 = vld [vmem:[%s4] sm:$0xf]
        %vm516 = vcmask 64512
        %v518 = vsel %vm516, %v515, 0
        %520 = vmatprep.subr.mxu0 %v514
        %521 = vmatpush1.msra.mxu0 %v513
        %522 = vmatprep.subr.mxu0 0.0
        %523 = vmatpush1.msra.mxu0 0.0
        %524 = vmatprep.subr.mxu0 0.0
        %525 = vmatpush1.msra.mxu0 0.0
        %526 = vmatprep.subr.mxu0 0.0
        %527 = vmatpush1.msra.mxu0 0.0
        %528 = vmatprep.subr.mxu0 0.0
        %529 = vmatpush1.msra.mxu0 0.0
        %530 = vmatprep.subr.mxu0 0.0
        %531 = vmatpush1.msra.mxu0 0.0
        %532 = vmatprep.subr.mxu0 0.0
        %533 = vmatpush1.msra.mxu0 0.0
        %534 = vmatprep.subr.mxu0 0.0
        %535 = vmatpush1.msra.mxu0 0.0
        %536 = vmatprep.subr.mxu0 0.0
        %537 = vmatpush1.msra.mxu0 0.0
        %538 = vmatprep.subr.mxu0 0.0
        %539 = vmatpush1.msra.mxu0 0.0
        %540 = vmatprep.subr.mxu0 0.0
        %541 = vmatpush1.msra.mxu0 0.0
        %542 = vmatprep.subr.mxu0 0.0
        %543 = vmatpush1.msra.mxu0 0.0
        %544 = vmatprep.subr.mxu0 0.0
        %545 = vmatpush1.msra.mxu0 0.0
        %546 = vmatprep.subr.mxu0 0.0
        %547 = vmatpush1.msra.mxu0 0.0
        %548 = vmatprep.subr.mxu0 0.0
        %549 = vmatpush1.msra.mxu0 0.0
        %550 = vmatprep.subr.mxu0 0.0
        %551 = vmatpush1.msra.mxu0 0.0
        %552 = vmatprep.subr.mxu0 0.0
        %553 = vmatpush1.msra.mxu0 0.0
        %554 = vmatprep.subr.mxu0 0.0
        %555 = vmatpush1.msra.mxu0 0.0
        %556 = vmatprep.subr.mxu0 0.0
        %557 = vmatpush1.msra.mxu0 0.0
        %558 = vmatprep.subr.mxu0 0.0
        %559 = vmatpush1.msra.mxu0 0.0
        %560 = vmatprep.subr.mxu0 0.0
        %561 = vmatpush1.msra.mxu0 0.0
        %562 = vmatprep.subr.mxu0 0.0
        %563 = vmatpush1.msra.mxu0 0.0
        %564 = vmatprep.subr.mxu0 0.0
        %565 = vmatpush1.msra.mxu0 0.0
        %566 = vmatprep.subr.mxu0 0.0
        %567 = vmatpush1.msra.mxu0 0.0
        %568 = vmatprep.subr.mxu0 0.0
        %569 = vmatpush1.msra.mxu0 0.0
        %570 = vmatprep.subr.mxu0 0.0
        %571 = vmatpush1.msra.mxu0 0.0
        %572 = vmatprep.subr.mxu0 0.0
        %573 = vmatpush1.msra.mxu0 0.0
        %574 = vmatprep.subr.mxu0 0.0
        %575 = vmatpush1.msra.mxu0 0.0
        %576 = vmatprep.subr.mxu0 0.0
        %577 = vmatpush1.msra.mxu0 0.0
        %578 = vmatprep.subr.mxu0 0.0
        %579 = vmatpush1.msra.mxu0 0.0
        %580 = vmatprep.subr.mxu0 0.0
        %581 = vmatpush1.msra.mxu0 0.0
        %582 = vmatprep.subr.mxu0 0.0
        %583 = vmatpush1.msra.mxu0 0.0
        %584 = vmatprep.mubr.f32.mxu0 0.0
        %585 = vmatmul.mubr.f32.gmra.mrb[0].mxu0 %v518
        %v586 = vpop.f32.mrb[0].mxu0
        %v587 = vadd.f32 0.0, %v586
        %v588 = vpop.f32.mrb[0].mxu0
        %v589 = vadd.f32 0.0, %v588
        %590 = vdwg.mxu0
        %v593 = vcombine.low %v587, %v589
        %595 = vst [vmem:[%s267] sm:$0xff] %v593
        %s596 = sand.u32 %s162, 1
        %s597 = scalar_lea.sflag [#allocation4], %s596
        %s598 = sand.u32 %s162, 1
        %s599 = smul.addr %s598, 8
        %s600 = scalar_lea.vmem [#allocation5], %s599
        // Predicated region
        $region49: #{tpu_custom_call.1} parent=43 // pred_check
          %p601 = pneg %p172
        $region50: #{tpu_custom_call.1} parent=43 // pred_check_branch
          %603 = sbr.rel (%p601) target = $region52
        $region51: #{tpu_custom_call.1} parent=43 // pred_region
          %s605 = ssub.s32 128, 128
          %606 = vsyncadd %s597, %s605
          %s607 = smul.addr %s23, 2
          %s608 = smul.addr %s607, 64
          %s609 = scalar_lea.hbm %s6, %s608
          %s611 = sshll.u32 %s600, 4
          %s612 = int_to_ptr.vmem [resolvable:$true] %s611
          %614 = dma.vmem_to_hbm [thread:$0]  %s612, 128, %s609, %s597
        $region52: #{tpu_custom_call.1} parent=43 // pred_fallthru
          _
      $region44: #{tpu_custom_call.1} parent=5 // pred_fallthru
        _
      %p615 = scmp.le.s32.totalorder 2, %s18
      // Predicated region
      $region53: #{tpu_custom_call.1} parent=5 // pred_check
        %p616 = pneg %p615
      $region54: #{tpu_custom_call.1} parent=5 // pred_check_branch
        %618 = sbr.rel (%p616) target = $region56
      $region55: #{tpu_custom_call.1} parent=5 // pred_region
        %s619 = ssub.s32 %s18, 2
        // Predicated region
        $region57: #{tpu_custom_call.1} parent=55 // pred_check
          %p620 = pneg %p178
        $region58: #{tpu_custom_call.1} parent=55 // pred_check_branch
          %622 = sbr.rel (%p620) target = $region60
        $region59: #{tpu_custom_call.1} parent=55 // pred_region
          %s623 = sand.u32 %s163, 1
          %s624 = scalar_lea.sflag [#allocation4], %s623
          %s625 = sand.u32 %s163, 1
          %s626 = smul.addr %s625, 8
          %s627 = scalar_lea.vmem [#allocation5], %s626
          %628 = dma.done %s624, 128
        $region60: #{tpu_custom_call.1} parent=55 // pred_fallthru
          _
      $region56: #{tpu_custom_call.1} parent=5 // pred_fallthru
        _
    $region6: #{tpu_custom_call.1} parent=1 // loop_footer
      %s22 = sadd.s32 1, %s18
    $region7: #{tpu_custom_call.1} parent=1 // loop_footer_branch
      %17 = sbr.rel target = $region3
    $region8: #{tpu_custom_call.1} parent=1 // loop_exit
      _
    %629 = vsyncpa [#allocation3], 1
    %s630 = scalar_lea.sflag [#allocation3], 1
    %631 = vsyncpa %s630, 1
    %632 = vsyncpa [#allocation4], 1
    %s633 = scalar_lea.sflag [#allocation4], 1
    %634 = vsyncpa %s633, 1

</llo_original>
